<compile_context>
chip_gen: v5e
topology: v5e:2x2
jax: 0.10.0
libtpu: 0.0.40
codegen_flags: <defaults>
</compile_context>

<pallas_src>
import math
import functools

import jax
import jax.numpy as jnp
from jax.experimental import pallas as pl
from jax.experimental.pallas import tpu as pltpu


# ----------------------------------------------------------------------------
# Parameter setup (plain JAX): deterministic sinusoidal table, same math as
# the module's sinusoidal_init_.
# ----------------------------------------------------------------------------
def sinusoidal_pe(max_len, d_model, dtype=jnp.float32):
    position = jnp.arange(max_len, dtype=jnp.float32)[:, None]                  # (S, 1)
    div_term = jnp.exp(
        -math.log(10000.0) * jnp.arange(0, d_model, 2, dtype=jnp.float32) / d_model
    )                                                                            # (D/2,)
    angles = position * div_term                                                 # (S, D/2)
    pe = jnp.zeros((max_len, d_model), jnp.float32)
    pe = pe.at[:, 0::2].set(jnp.sin(angles))
    pe = pe.at[:, 1::2].set(jnp.cos(angles))
    return pe[:, None, :].astype(dtype)                                          # (S, 1, D)


# ----------------------------------------------------------------------------
# Kernels
# ----------------------------------------------------------------------------
def _pe_add_kernel(seed_ref, x_ref, pe_ref, o_ref, *, batch, d, dropout):
    """Add pe (broadcast over `batch` lane-groups of width d) + optional dropout.

    dropout is None (eval / p == 0) or (threshold, scale) for the on-chip-PRNG
    train path.  The static slice loop avoids any (tile_s, B*D) broadcast /
    bits temporary: all intermediates are (tile_s, d).
    """
    if dropout is not None:
        # Separate seed words: calls with consecutive seeds cannot reuse the
        # stream of an adjacent block (review correctness note).
        pltpu.prng_seed(seed_ref[0], pl.program_id(0))
    pe_blk = pe_ref[...]                                       # (tile_s, d)
    for b in range(batch):                                     # static, zero-cost slices
        sl = slice(b * d, (b + 1) * d)                         # 128-aligned when batch > 1
        y = x_ref[:, sl] + pe_blk
        if dropout is not None:
            threshold, scale = dropout
            bits = pltpu.bitcast(pltpu.prng_random_bits(y.shape), jnp.uint32)
            keep = bits >= jnp.uint32(threshold)               # P(keep) = 1 - p
            y = jnp.where(keep, y * jnp.asarray(scale, y.dtype), jnp.zeros_like(y))
        o_ref[:, sl] = y


def _pe_add_bits_kernel(seed_ref, x_ref, pe_ref, bits_ref, o_ref, *, batch, d,
                        threshold, scale):
    """Train-mode fallback for non-TPU backends: mask bits streamed in."""
    del seed_ref
    pe_blk = pe_ref[...]
    for b in range(batch):
        sl = slice(b * d, (b + 1) * d)
        y = x_ref[:, sl] + pe_blk
        keep = bits_ref[:, sl] >= jnp.uint32(threshold)
        y = jnp.where(keep, y * jnp.asarray(scale, y.dtype), jnp.zeros_like(y))
        o_ref[:, sl] = y


# ----------------------------------------------------------------------------
# Wrapper
# ----------------------------------------------------------------------------
def positional_encoding(x, pe, *, p_dropout=0.1, training=False, seed=0,
                        tile_s=None, tile_bytes_target=6 * 1024 * 1024,
                        use_hw_prng=None, donate_x=False):
    """x: [S, B, D]; pe: [max_len, 1, D].  Returns dropout(x + pe[:S])."""
    S, B, D = x.shape
    assert pe.shape[0] >= S and pe.shape[2] == D, "pe too short / wrong d_model"
    dtype = x.dtype
    itemsize = dtype.itemsize
    cols = B * D

    # Free (row-major) reshape to a lane-dense 2-D view: minor dim = B*D.
    x2 = x.reshape(S, cols)
    pe2 = pe[:S, 0, :].astype(dtype)                   # (S, D): small

    # pe broadcast strategy: keep pe small and replicate over batch in-kernel
    # (static D-slice loop) when the slices are 128-aligned; otherwise pre-tile
    # wrapper-side (only hit for tiny/unaligned D, trivial traffic there).
    if B == 1:
        pe_in, bcast = pe2, 1
        # TODO(synk): for B == 1 the pe stream equals the x stream; computing
        # pe in-kernel (row iota + sin/cos on the EUP) would cut read traffic
        # ~50% on this mem-bound op.
    elif D % 128 == 0:
        pe_in, bcast = pe2, B
    else:
        pe_in, bcast = jnp.tile(pe2, (1, B)), 1        # (S, B*D)
    d_slice = pe_in.shape[1]

    apply_dropout = bool(training) and float(p_dropout) > 0.0
    if use_hw_prng is None:
        use_hw_prng = jax.default_backend() == "tpu"
    stream_bits = apply_dropout and not use_hw_prng

    # ---- generation-aware VMEM budget & tile size ---------------------------
    try:
        vmem_cap = int(pltpu.get_tpu_info().vmem_capacity_bytes)
    except Exception:
        vmem_cap = 64 * 1024 * 1024                    # conservative (v7x per-TC)
    vmem_cap = max(32 * 1024 * 1024, min(vmem_cap, 128 * 1024 * 1024))
    vmem_budget = (vmem_cap * 7) // 8                  # leave Mosaic scratch headroom

    # Per-row VMEM cost: double-buffered x/out/pe (+ streamed bits) tiles plus
    # the live per-slice dropout intermediates (y + u32 bits + mask).
    row_cost = 2 * cols * itemsize + 2 * cols * itemsize + 2 * d_slice * itemsize
    if stream_bits:
        row_cost += 2 * cols * 4
    if apply_dropout:
        row_cost += d_slice * (itemsize + 8)

    if tile_s is None:
        rows_target = max(8, tile_bytes_target // max(cols * itemsize, 1))
        rows_budget = max(8, vmem_budget // max(row_cost, 1))
        rows = max(8, (min(rows_target, rows_budget) // 8) * 8)
        if S > 8:
            # Keep >= 2 grid steps so v7x can split the "parallel" axis across
            # its two TensorCores (v5e/v6e unaffected).
            half8 = (((S + 1) // 2 + 7) // 8) * 8
            rows = min(rows, max(8, half8))
        tile_s = S if rows >= S else rows
    tile_s = int(min(tile_s, S))
    if tile_s < S:
        tile_s = max(8, (tile_s // 8) * 8)             # (8, 128) block constraint
    grid = (pl.cdiv(S, tile_s),)

    vmem_limit = int(max(32 * 1024 * 1024,
                         min(vmem_cap - 2 * 1024 * 1024,
                             tile_s * row_cost + 8 * 1024 * 1024)))

    x_spec = pl.BlockSpec((tile_s, cols), lambda i, seed_ref: (i, 0))
    pe_spec = pl.BlockSpec((tile_s, d_slice), lambda i, seed_ref: (i, 0))
    out_spec = pl.BlockSpec((tile_s, cols), lambda i, seed_ref: (i, 0))

    seed_arr = jnp.asarray([seed], jnp.int32)
    # Keep-prob bias is <= 2^-32 (and p == 1.0 keeps ~nothing rather than
    # exactly nothing) -- negligible; documented per review.
    threshold = min(int(round(float(p_dropout) * (2.0 ** 32))), 2 ** 32 - 1)
    scale = 1.0 / (1.0 - float(p_dropout)) if apply_dropout else 1.0

    if not apply_dropout:
        kernel = functools.partial(_pe_add_kernel, batch=bcast, d=d_slice,
                                   dropout=None)
        in_specs = [x_spec, pe_spec]
        operands = (seed_arr, x2, pe_in)
    elif use_hw_prng:
        kernel = functools.partial(_pe_add_kernel, batch=bcast, d=d_slice,
                                   dropout=(threshold, scale))
        in_specs = [x_spec, pe_spec]
        operands = (seed_arr, x2, pe_in)
    else:
        # Non-TPU fallback: one extra x-sized HBM read for the mask bits.
        bits = jax.random.bits(jax.random.PRNGKey(seed), (S, cols), jnp.uint32)
        bits_spec = pl.BlockSpec((tile_s, cols), lambda i, seed_ref: (i, 0))
        kernel = functools.partial(_pe_add_bits_kernel, batch=bcast, d=d_slice,
                                   threshold=threshold, scale=scale)
        in_specs = [x_spec, pe_spec, bits_spec]
        operands = (seed_arr, x2, pe_in, bits)

    # x2 is call-arg index 1 (after the prefetched seed).  Aliasing it to the
    # output removes the second S x B*D HBM allocation, but only pays off when
    # the caller actually donates x (otherwise XLA inserts a defensive copy),
    # so it is opt-in.
    io_aliases = {1: 0} if donate_x else {}

    out2 = pl.pallas_call(
        kernel,
        out_shape=jax.ShapeDtypeStruct((S, cols), dtype),
        grid_spec=pltpu.PrefetchScalarGridSpec(
            num_scalar_prefetch=1,                     # seed lives in SMEM
            grid=grid,
            in_specs=in_specs,
            out_specs=out_spec,
        ),
        input_output_aliases=io_aliases,
        compiler_params=pltpu.CompilerParams(
            dimension_semantics=("parallel",),         # no cross-step carry
            vmem_limit_bytes=vmem_limit,
        ),
    )(*operands)
    return out2.reshape(S, B, D)


# ----------------------------------------------------------------------------
# Self-test
# ----------------------------------------------------------------------------
if __name__ == "__main__":
    P_DROPOUT = 0.1
    MAX_LEN = 64
    root = jax.random.PRNGKey(0)

    # Config 0: unaligned D (pe pre-tiled wrapper-side).
    # Config 1: 128-aligned D (in-kernel per-batch slice loop).
    for cfg_i, (S, B, D) in enumerate([(16, 2, 32), (16, 2, 128)]):
        kx = jax.random.fold_in(root, cfg_i)
        x = jax.random.normal(kx, (S, B, D), dtype=jnp.float32)
        pe = sinusoidal_pe(MAX_LEN, D)                 # (MAX_LEN, 1, D)
        ref = x + pe[:S]

        # Eval mode (dropout == identity): must match x + pe[:S].
        out_eval = jax.block_until_ready(
            positional_encoding(x, pe, p_dropout=P_DROPOUT, training=False))
        assert out_eval.shape == (S, B, D)
        assert jnp.allclose(out_eval, ref, atol=1e-6), f"eval-mode mismatch (cfg {cfg_i})"

        # Train mode: dropout mask + 1/(1-p) rescale.  Every surviving element
        # must equal the rescaled reference.
        out_train = jax.block_until_ready(
            positional_encoding(x, pe, p_dropout=P_DROPOUT, training=True,
                                seed=1234 + cfg_i))
        kept = out_train != 0.0
        assert bool(jnp.any(kept)), f"dropout dropped everything (cfg {cfg_i})"
        assert jnp.allclose(
            jnp.where(kept, out_train, 0.0),
            jnp.where(kept, ref / (1.0 - P_DROPOUT), 0.0),
            atol=1e-5,
        ), f"train-mode mismatch on kept elements (cfg {cfg_i})"

    print("KERNEL_OK")
</pallas_src>

<mosaic_0001>
module attributes {stable_mosaic.version = 11 : i64} {
  func.func @_pe_add_kernel(%arg0: i32, %arg1: memref<1xi32, #tpu.memory_space<smem>>, %arg2: memref<8x64xf32, #tpu.memory_space<vmem>>, %arg3: memref<8x64xf32, #tpu.memory_space<vmem>>, %arg4: memref<8x64xf32, #tpu.memory_space<vmem>>) attributes {dimension_semantics = [#tpu.dimension_semantics<parallel>], iteration_bounds = array<i64: 2>, scalar_prefetch = 1 : i64, scratch_operands = 0 : i64, tpu.core_type = #tpu.core_type<tc>, window_params = [{transform_indices = @transform_0, window_bounds = array<i64: 8, 64>}, {transform_indices = @transform_1, window_bounds = array<i64: 8, 64>}, {transform_indices = @transform_2, window_bounds = array<i64: 8, 64>}]} {
    %c0 = arith.constant 0 : index
    %c0_0 = arith.constant 0 : index
    %0 = vector.load %arg3[%c0, %c0_0] : memref<8x64xf32, #tpu.memory_space<vmem>>, vector<8x64xf32>
    %c0_1 = arith.constant 0 : index
    %c0_2 = arith.constant 0 : index
    %1 = vector.load %arg2[%c0_1, %c0_2] : memref<8x64xf32, #tpu.memory_space<vmem>>, vector<8x64xf32>
    %2 = arith.addf %1, %0 : vector<8x64xf32>
    %c0_3 = arith.constant 0 : index
    %c0_4 = arith.constant 0 : index
    %3 = vector.load %arg4[%c0_3, %c0_4] : memref<8x64xf32, #tpu.memory_space<vmem>>, vector<8x64xf32>
    tpu.vector_store %arg4[%c0_3, %c0_4], %2 {strides = array<i32>} : memref<8x64xf32, #tpu.memory_space<vmem>>, vector<8x64xf32>,
    return
  }
  func.func @transform_0(%arg0: i32, %arg1: memref<1xi32, #tpu.memory_space<smem>>) -> (i32, i32) {
    %c0_i32 = arith.constant 0 : i32
    %c0_i32_0 = arith.constant 0 : i32
    return %arg0, %c0_i32 : i32, i32
  }
  func.func @transform_1(%arg0: i32, %arg1: memref<1xi32, #tpu.memory_space<smem>>) -> (i32, i32) {
    %c0_i32 = arith.constant 0 : i32
    %c0_i32_0 = arith.constant 0 : i32
    return %arg0, %c0_i32 : i32, i32
  }
  func.func @transform_2(%arg0: i32, %arg1: memref<1xi32, #tpu.memory_space<smem>>) -> (i32, i32) {
    %c0_i32 = arith.constant 0 : i32
    %c0_i32_0 = arith.constant 0 : i32
    return %arg0, %c0_i32 : i32, i32
  }
}

</mosaic_0001>

<llo_original>
// kernel: tpu_custom_call.1
$region0: #{tpu_custom_call.1}
  #allocation0 [shape = 'u32[]', space=smem, size = 0x4, offset = 0x4, fixed_abs, tag = 'smem constant byte address 0x4 - core index']
  #allocation1 [shape = 'u32[72,128]{1,0:T(1,128)}', space=vmem, size = 0x9000, scoped, tag = 'internal scratch']
  #allocation2 [shape = 's32[1]{0}', space=sflag, size = 0x4, scoped, tag = 'scoped memory for tpu_custom_call.1']
  #allocation3 [shape = 's32[1]{0:T(128)S(6)}', space=smem, size = 0x200, scoped, tag = 'prefetched SMEM operand 0']
  %s0 = inlined_call_operand.<no memory space> [shape: s32[1], index: 0, kind: input, shape index: {}]
  %s1 = inlined_call_operand.hbm [shape: f32[16,64], index: 1, kind: input, shape index: {}]
  %s2 = inlined_call_operand.hbm [shape: f32[16,64], index: 2, kind: input, shape index: {}]
  %s3 = inlined_call_operand.hbm [shape: f32[16,64], index: 3, kind: output, shape index: {}]
  %s4 = sld [smem:[#allocation0]]
  $region49: #{tpu_custom_call.1} parent=0
    _
  %s6 = ssub.s32 1, %s4
  %s7 = scalar_select 0, %s6, %s4
  %8 = sst [smem:[#allocation3]] %s0
  $region1: #{tpu_custom_call.1} parent=0
    #allocation4 [shape = 'u8[8192]{0}', space=vmem, size = 0x2000, scoped, tag = 'input window, operand 1']
    #allocation5 [shape = 's32[2]{0}', space=sflag, size = 0x8, scoped, tag = 'scoped memory for tpu_custom_call.1']
    #allocation6 [shape = 's32[2]{0}', space=sflag, size = 0x8, scoped, tag = 'scoped memory for tpu_custom_call.1']
    #allocation7 [shape = 'u8[8192]{0}', space=vmem, size = 0x2000, scoped, tag = 'input window, operand 2']
    #allocation8 [shape = 's32[2]{0}', space=sflag, size = 0x8, scoped, tag = 'scoped memory for tpu_custom_call.1']
    #allocation9 [shape = 'u8[8192]{0}', space=vmem, size = 0x2000, scoped, tag = 'output window, operand 0']
    %9 = vsyncpa [#allocation5], 0
    %s10 = scalar_lea.sflag [#allocation5], 1
    %11 = vsyncpa %s10, 0
    %12 = vsyncpa [#allocation8], 0
    %s13 = scalar_lea.sflag [#allocation8], 1
    %14 = vsyncpa %s13, 0
    %15 = vsyncpa [#allocation6], 0
    %s16 = scalar_lea.sflag [#allocation6], 1
    %17 = vsyncpa %s16, 0
    loop: start=0, step=1, limit=4
    $region2: #{tpu_custom_call.1} parent=1 // loop_pre_header
      _
    $region3: #{tpu_custom_call.1} parent=1 // loop_header
      %s19 = sphi 0, %s23
      %p20 = scmp.ge.s32.totalorder %s19, 4
      %s29 = sphi 0, %s31
      %s32 = sphi 0, %s29
      %s33 = sphi 0, %s32
      %s49 = sphi 0, %s33
      %s55 = sphi 0, %s57
      %s58 = sphi 0, %s55
      %s59 = sphi 0, %s58
      %s75 = sphi 0, %s59
      %s81 = sphi 0, %s83
      %s84 = sphi 0, %s81
      %s85 = sphi 0, %s84
      %s101 = sphi 0, %s85
    $region4: #{tpu_custom_call.1} parent=1 // loop_header_branch
      %22 = sbr.rel (%p20) target = $region8
    $region5: #{tpu_custom_call.1} parent=1 // loop_body
      %s24 = ssub.s32 %s19, 1
      %s25 = ssub.s32 %s19, 2
      %s26 = sadd.s32 %s19, 1
      %s27 = ssub.s32 %s19, %s26
      %p28 = scmp.eq.s32.totalorder %s27, 0
      %s30 = sadd.s32 %s29, 1
      %s31 = scalar_select %p28, %s29, %s30
      %p34 = pneg %p28
      %p35 = scmp.eq.s32.totalorder %s19, 1
      %p36 = por %p34, %p35
      %p37 = scmp.ne.s32.totalorder %s29, %s32
      %p38 = scmp.eq.s32.totalorder %s19, 0
      %p39 = por %p37, %p38
      %p40 = scmp.ne.s32.totalorder %s29, %s32
      %p41 = scmp.eq.s32.totalorder %s24, 1
      %p42 = por %p40, %p41
      %p43 = scmp.ne.s32.totalorder %s32, %s33
      %p44 = scmp.eq.s32.totalorder %s24, 0
      %p45 = por %p43, %p44
      %p46 = scmp.ne.s32.totalorder %s32, %s33
      %p47 = scmp.eq.s32.totalorder %s25, 1
      %p48 = por %p46, %p47
      %p50 = scmp.ne.s32.totalorder %s33, %s49
      %p51 = scmp.eq.s32.totalorder %s25, 0
      %p52 = por %p50, %p51
      %s53 = ssub.s32 %s19, %s26
      %p54 = scmp.eq.s32.totalorder %s53, 0
      %s56 = sadd.s32 %s55, 1
      %s57 = scalar_select %p54, %s55, %s56
      %p60 = pneg %p54
      %p61 = scmp.eq.s32.totalorder %s19, 1
      %p62 = por %p60, %p61
      %p63 = scmp.ne.s32.totalorder %s55, %s58
      %p64 = scmp.eq.s32.totalorder %s19, 0
      %p65 = por %p63, %p64
      %p66 = scmp.ne.s32.totalorder %s55, %s58
      %p67 = scmp.eq.s32.totalorder %s24, 1
      %p68 = por %p66, %p67
      %p69 = scmp.ne.s32.totalorder %s58, %s59
      %p70 = scmp.eq.s32.totalorder %s24, 0
      %p71 = por %p69, %p70
      %p72 = scmp.ne.s32.totalorder %s58, %s59
      %p73 = scmp.eq.s32.totalorder %s25, 1
      %p74 = por %p72, %p73
      %p76 = scmp.ne.s32.totalorder %s59, %s75
      %p77 = scmp.eq.s32.totalorder %s25, 0
      %p78 = por %p76, %p77
      %s79 = ssub.s32 %s19, %s26
      %p80 = scmp.eq.s32.totalorder %s79, 0
      %s82 = sadd.s32 %s81, 1
      %s83 = scalar_select %p80, %s81, %s82
      %p86 = pneg %p80
      %p87 = scmp.eq.s32.totalorder %s19, 1
      %p88 = por %p86, %p87
      %p89 = scmp.ne.s32.totalorder %s81, %s84
      %p90 = scmp.eq.s32.totalorder %s19, 0
      %p91 = por %p89, %p90
      %p92 = scmp.ne.s32.totalorder %s81, %s84
      %p93 = scmp.eq.s32.totalorder %s24, 1
      %p94 = por %p92, %p93
      %p95 = scmp.ne.s32.totalorder %s84, %s85
      %p96 = scmp.eq.s32.totalorder %s24, 0
      %p97 = por %p95, %p96
      %p98 = scmp.ne.s32.totalorder %s84, %s85
      %p99 = scmp.eq.s32.totalorder %s25, 1
      %p100 = por %p98, %p99
      %p102 = scmp.ne.s32.totalorder %s85, %s101
      %p103 = scmp.eq.s32.totalorder %s25, 0
      %p104 = por %p102, %p103
      %p105 = scmp.le.s32.totalorder 1, %s19
      %p106 = scmp.lt.s32.totalorder %s19, 3
      %p107 = pnand %p105, %p106
      %p108 = pneg %p107
      // Predicated region
      $region9: #{tpu_custom_call.1} parent=5 // pred_check
        _
      $region10: #{tpu_custom_call.1} parent=5 // pred_check_branch
        %110 = sbr.rel (%p107) target = $region12
      $region11: #{tpu_custom_call.1} parent=5 // pred_region
        %s111 = ssub.s32 %s19, 1
      $region12: #{tpu_custom_call.1} parent=5 // pred_fallthru
        _
      %p112 = scmp.lt.s32.totalorder %s19, 2
      // Predicated region
      $region13: #{tpu_custom_call.1} parent=5 // pred_check
        %p113 = pneg %p112
      $region14: #{tpu_custom_call.1} parent=5 // pred_check_branch
        %115 = sbr.rel (%p113) target = $region16
      $region15: #{tpu_custom_call.1} parent=5 // pred_region
        // Predicated region
        $region17: #{tpu_custom_call.1} parent=15 // pred_check
          %p116 = pneg %p39
        $region18: #{tpu_custom_call.1} parent=15 // pred_check_branch
          %118 = sbr.rel (%p116) target = $region20
        $region19: #{tpu_custom_call.1} parent=15 // pred_region
          %s119 = sand.u32 %s29, 1
          %s120 = scalar_lea.sflag [#allocation5], %s119
          %s121 = sand.u32 %s29, 1
          %s122 = smul.addr %s121, 8
          %s123 = scalar_lea.vmem [#allocation4], %s122
          %125 = vsyncadd %s120, 0
          %s126 = smul.addr %s19, 8
          %s127 = scalar_lea.hbm %s1, %s126
          %s129 = sshll.u32 %s127, 4
          %s130 = int_to_ptr.hbm [resolvable:$true] %s129
          %s131 = sshll.u32 %s123, 4
          %s132 = int_to_ptr.vmem [resolvable:$true] %s131
          %134 = dma.hbm_to_vmem [thread:$0]  %s130, 128, %s132, %s120
        $region20: #{tpu_custom_call.1} parent=15 // pred_fallthru
          _
        // Predicated region
        $region21: #{tpu_custom_call.1} parent=15 // pred_check
          %p135 = pneg %p65
        $region22: #{tpu_custom_call.1} parent=15 // pred_check_branch
          %137 = sbr.rel (%p135) target = $region24
        $region23: #{tpu_custom_call.1} parent=15 // pred_region
          %s138 = sand.u32 %s55, 1
          %s139 = scalar_lea.sflag [#allocation8], %s138
          %s140 = sand.u32 %s55, 1
          %s141 = smul.addr %s140, 8
          %s142 = scalar_lea.vmem [#allocation7], %s141
          %144 = vsyncadd %s139, 0
          %s145 = smul.addr %s19, 8
          %s146 = scalar_lea.hbm %s2, %s145
          %s148 = sshll.u32 %s146, 4
          %s149 = int_to_ptr.hbm [resolvable:$true] %s148
          %s150 = sshll.u32 %s142, 4
          %s151 = int_to_ptr.vmem [resolvable:$true] %s150
          %153 = dma.hbm_to_vmem [thread:$0]  %s149, 128, %s151, %s139
        $region24: #{tpu_custom_call.1} parent=15 // pred_fallthru
          _
      $region16: #{tpu_custom_call.1} parent=5 // pred_fallthru
        _
      %p154 = scmp.le.s32.totalorder 1, %s19
      %p155 = scmp.lt.s32.totalorder %s19, 3
      %p156 = pnand %p154, %p155
      %p157 = pneg %p156
      // Predicated region
      $region25: #{tpu_custom_call.1} parent=5 // pred_check
        _
      $region26: #{tpu_custom_call.1} parent=5 // pred_check_branch
        %159 = sbr.rel (%p156) target = $region28
      $region27: #{tpu_custom_call.1} parent=5 // pred_region
        %s160 = ssub.s32 %s19, 1
        %s161 = sand.u32 %s32, 1
        %s162 = scalar_lea.sflag [#allocation5], %s161
        %s163 = sand.u32 %s32, 1
        %s164 = smul.addr %s163, 8
        %s165 = scalar_lea.vmem [#allocation4], %s164
        // Predicated region
        $region29: #{tpu_custom_call.1} parent=27 // pred_check
          %p166 = pneg %p45
        $region30: #{tpu_custom_call.1} parent=27 // pred_check_branch
          %168 = sbr.rel (%p166) target = $region32
        $region31: #{tpu_custom_call.1} parent=27 // pred_region
          %170 = dma.done %s162, 128
        $region32: #{tpu_custom_call.1} parent=27 // pred_fallthru
          _
        %s171 = sand.u32 %s58, 1
        %s172 = scalar_lea.sflag [#allocation8], %s171
        %s173 = sand.u32 %s58, 1
        %s174 = smul.addr %s173, 8
        %s175 = scalar_lea.vmem [#allocation7], %s174
        // Predicated region
        $region33: #{tpu_custom_call.1} parent=27 // pred_check
          %p176 = pneg %p71
        $region34: #{tpu_custom_call.1} parent=27 // pred_check_branch
          %178 = sbr.rel (%p176) target = $region36
        $region35: #{tpu_custom_call.1} parent=27 // pred_region
          %180 = dma.done %s172, 128
        $region36: #{tpu_custom_call.1} parent=27 // pred_fallthru
          _
        %s181 = sand.u32 %s32, 1
        %s182 = scalar_lea.sflag [#allocation5], %s181
        %s183 = sand.u32 %s32, 1
        %s184 = smul.addr %s183, 8
        %s185 = scalar_lea.vmem [#allocation4], %s184
        %p186 = pneg %p45
        %p187 = pneg %p42
        %s188 = sand.u32 %s58, 1
        %s189 = scalar_lea.sflag [#allocation8], %s188
        %s190 = sand.u32 %s58, 1
        %s191 = smul.addr %s190, 8
        %s192 = scalar_lea.vmem [#allocation7], %s191
        %p193 = pneg %p71
        %p194 = pneg %p68
        %p195 = pneg %p97
        %p196 = pneg %p94
        %s197 = sand.u32 %s84, 1
        %s198 = scalar_lea.sflag [#allocation6], %s197
        %s199 = sand.u32 %s84, 1
        %s200 = smul.addr %s199, 8
        %s201 = scalar_lea.vmem [#allocation9], %s200
        %v202 = vld [vmem:[%s175] sm:$0xff]
        %v203 = vld [vmem:[%s165] sm:$0xff]
        %v204 = vadd.f32 %v203, %v202
        %vm205 = vcmask 523264
        %206 = vst.msk [vmem:[%s201] sm:$0xff] %vm205, %v204
        %s207 = sand.u32 %s84, 1
        %s208 = scalar_lea.sflag [#allocation6], %s207
        %s209 = sand.u32 %s84, 1
        %s210 = smul.addr %s209, 8
        %s211 = scalar_lea.vmem [#allocation9], %s210
        // Predicated region
        $region37: #{tpu_custom_call.1} parent=27 // pred_check
          %p212 = pneg %p94
        $region38: #{tpu_custom_call.1} parent=27 // pred_check_branch
          %214 = sbr.rel (%p212) target = $region40
        $region39: #{tpu_custom_call.1} parent=27 // pred_region
          %216 = vsyncadd %s208, 0
          %s217 = smul.addr %s24, 8
          %s218 = scalar_lea.hbm %s3, %s217
          %s220 = sshll.u32 %s211, 4
          %s221 = int_to_ptr.vmem [resolvable:$true] %s220
          %s222 = sshll.u32 %s218, 4
          %s223 = int_to_ptr.hbm [resolvable:$true] %s222
          %225 = dma.vmem_to_hbm [thread:$0]  %s221, 128, %s223, %s208
        $region40: #{tpu_custom_call.1} parent=27 // pred_fallthru
          _
      $region28: #{tpu_custom_call.1} parent=5 // pred_fallthru
        _
      %p226 = scmp.le.s32.totalorder 2, %s19
      // Predicated region
      $region41: #{tpu_custom_call.1} parent=5 // pred_check
        %p227 = pneg %p226
      $region42: #{tpu_custom_call.1} parent=5 // pred_check_branch
        %229 = sbr.rel (%p227) target = $region44
      $region43: #{tpu_custom_call.1} parent=5 // pred_region
        %s230 = ssub.s32 %s19, 2
        // Predicated region
        $region45: #{tpu_custom_call.1} parent=43 // pred_check
          %p231 = pneg %p100
        $region46: #{tpu_custom_call.1} parent=43 // pred_check_branch
          %233 = sbr.rel (%p231) target = $region48
        $region47: #{tpu_custom_call.1} parent=43 // pred_region
          %s234 = sand.u32 %s85, 1
          %s235 = scalar_lea.sflag [#allocation6], %s234
          %s236 = sand.u32 %s85, 1
          %s237 = smul.addr %s236, 8
          %s238 = scalar_lea.vmem [#allocation9], %s237
          %240 = dma.done %s235, 128
        $region48: #{tpu_custom_call.1} parent=43 // pred_fallthru
          _
      $region44: #{tpu_custom_call.1} parent=5 // pred_fallthru
        _
    $region6: #{tpu_custom_call.1} parent=1 // loop_footer
      %s23 = sadd.s32 1, %s19
    $region7: #{tpu_custom_call.1} parent=1 // loop_footer_branch
      %18 = sbr.rel target = $region3
    $region8: #{tpu_custom_call.1} parent=1 // loop_exit
      _
    %241 = vsyncpa [#allocation5], 1
    %s242 = scalar_lea.sflag [#allocation5], 1
    %243 = vsyncpa %s242, 1
    %244 = vsyncpa [#allocation8], 1
    %s245 = scalar_lea.sflag [#allocation8], 1
    %246 = vsyncpa %s245, 1
    %247 = vsyncpa [#allocation6], 1
    %s248 = scalar_lea.sflag [#allocation6], 1
    %249 = vsyncpa %s248, 1

</llo_original>
